<compile_context>
chip_gen: v7x
topology: tpu7x:2x2x1
jax: 0.10.0
libtpu: 0.0.40
codegen_flags: <defaults>
</compile_context>

<pallas_src>
import functools

import jax
import jax.numpy as jnp
from jax.experimental import pallas as pl
from jax.experimental.pallas import tpu as pltpu

SUBLANE = 8
LANE = 128
MiB = 1024 * 1024


def _cdiv(a, b):
    return -(-a // b)


def _round_up(n, m):
    return _cdiv(n, m) * m


def _pad_rows(a, target_rows):
    """Zero-pad axis 0 of `a` up to `target_rows`."""
    if a.shape[0] == target_rows:
        return a
    return jnp.pad(a, ((0, target_rows - a.shape[0]),) + ((0, 0),) * (a.ndim - 1))


def _pad_axis_to(a, axis, target):
    if a.shape[axis] == target:
        return a
    pad = [(0, 0)] * a.ndim
    pad[axis] = (0, target - a.shape[axis])
    return jnp.pad(a, pad)


def _vmem_limit_bytes():
    """Generation-aware scoped-VMEM limit (~96 MiB v5e/v6e, ~48 MiB v7x)."""
    try:
        cap = int(pltpu.get_tpu_info().vmem_capacity_bytes)
    except Exception:
        return 32 * MiB
    return max(32 * MiB, min((cap * 3) // 4, 96 * MiB))


def _resident_spec(block_shape, index_map):
    """BlockSpec for a grid-invariant operand; single-buffered if supported."""
    try:
        return pl.BlockSpec(block_shape, index_map, pipeline_mode=pl.Buffered(1))
    except (TypeError, AttributeError):
        return pl.BlockSpec(block_shape, index_map)


# ----------------------------- kernels ------------------------------------


def _encoder_kernel(x_ref, w1_ref, b1_ref, w2_ref, b2_ref, o_ref):
    # x arrives as f32; cast to bf16 on the VPU (free, kernel is DMA-bound).
    x = x_ref[...].astype(w1_ref.dtype)
    h = jnp.dot(x, w1_ref[...], preferred_element_type=jnp.float32)
    h = jnp.maximum(h + b1_ref[...], 0.0)                      # bias+ReLU, f32
    y = jnp.dot(h.astype(w2_ref.dtype), w2_ref[...],
                preferred_element_type=jnp.float32)
    o_ref[...] = (y + b2_ref[...]).astype(o_ref.dtype)


def _encoder_kernel_htiled(x_ref, w1_ref, b1_ref, w2_ref, b2_ref, o_ref,
                           acc_ref):
    # Hidden dim tiled (grid axis 1, "arbitrary"); accumulate second matmul
    # into an f32 VMEM scratch; finalize with bias add on the last h-step.
    h_idx = pl.program_id(1)

    @pl.when(h_idx == 0)
    def _init():
        acc_ref[...] = jnp.zeros_like(acc_ref)

    x = x_ref[...].astype(w1_ref.dtype)
    h = jnp.dot(x, w1_ref[...], preferred_element_type=jnp.float32)
    h = jnp.maximum(h + b1_ref[...], 0.0)
    acc_ref[...] += jnp.dot(h.astype(w2_ref.dtype), w2_ref[...],
                            preferred_element_type=jnp.float32)

    @pl.when(h_idx == pl.num_programs(1) - 1)
    def _finalize():
        o_ref[...] = (acc_ref[...] + b2_ref[...]).astype(o_ref.dtype)


# ----------------------------- wrapper -------------------------------------


@functools.partial(
    jax.jit,
    static_argnames=("small_batch_max", "max_tile_b", "force_hidden_tile",
                     "compute_dtype"))
def encoder_forward(x, w1, b1, w2, b2, *, small_batch_max=512,
                    max_tile_b=1024, force_hidden_tile=None,
                    compute_dtype=jnp.bfloat16):
    """x: (B, D); w1: (D, H); b1: (1, H); w2: (H, E); b2: (1, E) -> (B, E) f32."""
    B, D = x.shape
    H = w1.shape[1]
    E = w2.shape[1]

    # One-time weight cast to bf16 (halves resident VMEM); biases stay f32.
    w1c = w1.astype(compute_dtype)
    w2c = w2.astype(compute_dtype)
    b1c = b1.astype(jnp.float32)
    b2c = b2.astype(jnp.float32)

    vmem_limit = _vmem_limit_bytes()

    # ---- Small path: whole problem in one VMEM-resident call, no grid. ----
    if B <= small_batch_max and force_hidden_tile is None:
        return pl.pallas_call(
            _encoder_kernel,
            out_shape=jax.ShapeDtypeStruct((B, E), jnp.float32),
            in_specs=[pl.BlockSpec(memory_space=pltpu.MemorySpace.VMEM)] * 5,
            out_specs=pl.BlockSpec(memory_space=pltpu.MemorySpace.VMEM),
            compiler_params=pltpu.CompilerParams(
                vmem_limit_bytes=vmem_limit),
        )(x, w1c, b1c, w2c, b2c)

    # ---- Adaptive batch tiling: even block count (v7x megacore), <=1% pad.
    nb = max(2, _cdiv(B, max_tile_b))
    nb = _round_up(nb, 2)
    tile_b = _round_up(_cdiv(B, nb), SUBLANE)
    Bp = nb * tile_b
    xp = _pad_rows(x, Bp)

    # ---- Residency guard: weights single-buffered + streamed x/out tiles.
    bpe = jnp.dtype(compute_dtype).itemsize
    resident_need = ((D * H + H * E) * bpe + (H + E) * 4        # weights/bias
                     + 2 * tile_b * D * 4                       # x tiles (x2)
                     + 2 * tile_b * E * 4                       # out tiles (x2)
                     + 2 * tile_b * H * 4)                      # intermediate
    use_resident = (force_hidden_tile is None
                    and resident_need < int(0.8 * vmem_limit))

    if use_resident:
        out = pl.pallas_call(
            _encoder_kernel,
            out_shape=jax.ShapeDtypeStruct((Bp, E), jnp.float32),
            grid=(nb,),
            in_specs=[
                pl.BlockSpec((tile_b, D), lambda i: (i, 0)),
                _resident_spec((D, H), lambda i: (0, 0)),
                _resident_spec((1, H), lambda i: (0, 0)),
                _resident_spec((H, E), lambda i: (0, 0)),
                _resident_spec((1, E), lambda i: (0, 0)),
            ],
            out_specs=pl.BlockSpec((tile_b, E), lambda i: (i, 0)),
            compiler_params=pltpu.CompilerParams(
                dimension_semantics=("parallel",),
                vmem_limit_bytes=vmem_limit),
        )(xp, w1c, b1c, w2c, b2c)
        return out[:B]

    # ---- Fallback: weights too large to keep resident -> stream W1 columns /
    #      W2 rows in hidden-dim blocks, accumulate in f32 VMEM scratch. ----
    # TODO(synk): very large D or E would additionally need D/E tiling; the
    # fallback here only tiles the hidden dimension.
    tile_h = force_hidden_tile if force_hidden_tile is not None else 512
    tile_h = min(_round_up(tile_h, LANE), _round_up(H, LANE))
    Hp = _round_up(H, tile_h)
    nh = Hp // tile_h

    w1p = _pad_axis_to(w1c, 1, Hp)
    b1p = _pad_axis_to(b1c, 1, Hp)
    w2p = _pad_axis_to(w2c, 0, Hp)

    out = pl.pallas_call(
        _encoder_kernel_htiled,
        out_shape=jax.ShapeDtypeStruct((Bp, E), jnp.float32),
        grid=(nb, nh),
        in_specs=[
            pl.BlockSpec((tile_b, D), lambda i, h: (i, 0)),
            pl.BlockSpec((D, tile_h), lambda i, h: (0, h)),
            pl.BlockSpec((1, tile_h), lambda i, h: (0, h)),
            pl.BlockSpec((tile_h, E), lambda i, h: (h, 0)),
            _resident_spec((1, E), lambda i, h: (0, 0)),
        ],
        out_specs=pl.BlockSpec((tile_b, E), lambda i, h: (i, 0)),
        scratch_shapes=[pltpu.VMEM((tile_b, E), jnp.float32)],
        compiler_params=pltpu.CompilerParams(
            dimension_semantics=("parallel", "arbitrary"),
            vmem_limit_bytes=vmem_limit),
    )(xp, w1p, b1p, w2p, b2c)
    return out[:B]


# ----------------------------- test harness --------------------------------


def init_params(key, input_dim, hidden_dim, embedding_dim):
    # Deterministic synthetic init (PyTorch-style uniform bounds).
    # Weights stored pre-transposed as (in, out); biases as (1, out).
    k1, k2, k3, k4 = jax.random.split(key, 4)
    bound1 = 1.0 / jnp.sqrt(input_dim)
    bound2 = 1.0 / jnp.sqrt(hidden_dim)
    w1 = jax.random.uniform(k1, (input_dim, hidden_dim), jnp.float32,
                            -bound1, bound1)
    b1 = jax.random.uniform(k2, (1, hidden_dim), jnp.float32, -bound1, bound1)
    w2 = jax.random.uniform(k3, (hidden_dim, embedding_dim), jnp.float32,
                            -bound2, bound2)
    b2 = jax.random.uniform(k4, (1, embedding_dim), jnp.float32,
                            -bound2, bound2)
    return w1, b1, w2, b2


def _ref_bf16(x, w1, b1, w2, b2):
    # Reference with the same bf16-operand / f32-accumulate math as the kernel.
    h = jnp.dot(x.astype(jnp.bfloat16), w1.astype(jnp.bfloat16),
                preferred_element_type=jnp.float32)
    h = jnp.maximum(h + b1, 0.0)
    y = jnp.dot(h.astype(jnp.bfloat16), w2.astype(jnp.bfloat16),
                preferred_element_type=jnp.float32)
    return y + b2


def _ref_f32(x, w1, b1, w2, b2):
    return jnp.maximum(x @ w1 + b1, 0.0) @ w2 + b2


if __name__ == "__main__":
    key = jax.random.PRNGKey(0)
    kx, kp, kx2, kp2 = jax.random.split(key, 4)

    batch, input_dim, hidden_dim, embedding_dim = 8, 32, 64, 16
    x = jax.random.normal(kx, (batch, input_dim), jnp.float32)
    w1, b1, w2, b2 = init_params(kp, input_dim, hidden_dim, embedding_dim)

    # --- Small path (no grid, single VMEM-resident invocation). ---
    out = jax.block_until_ready(encoder_forward(x, w1, b1, w2, b2))
    assert out.shape == (batch, embedding_dim)
    assert jnp.allclose(out, _ref_bf16(x, w1, b1, w2, b2),
                        atol=1e-3, rtol=1e-3)
    assert jnp.allclose(out, _ref_f32(x, w1, b1, w2, b2),
                        atol=5e-2, rtol=5e-2)

    # --- Tiled resident path: non-multiple batch exercises adaptive tiling,
    #     even block count, and the small zero-pad of the remainder. ---
    big_batch = 600
    x2 = jax.random.normal(kx2, (big_batch, input_dim), jnp.float32)
    out2 = jax.block_until_ready(encoder_forward(x2, w1, b1, w2, b2))
    assert out2.shape == (big_batch, embedding_dim)
    assert jnp.allclose(out2, _ref_bf16(x2, w1, b1, w2, b2),
                        atol=1e-3, rtol=1e-3)
    assert jnp.allclose(out2, _ref_f32(x2, w1, b1, w2, b2),
                        atol=5e-2, rtol=5e-2)

    # --- Forced hidden-dim-tiled fallback (residency-guard path), 2 h-steps
    #     with the accumulator init/finalize pattern. ---
    hid2 = 256
    w1b, b1b, w2b, b2b = init_params(kp2, input_dim, hid2, embedding_dim)
    out3 = jax.block_until_ready(
        encoder_forward(x2, w1b, b1b, w2b, b2b, force_hidden_tile=128))
    assert out3.shape == (big_batch, embedding_dim)
    assert jnp.allclose(out3, _ref_bf16(x2, w1b, b1b, w2b, b2b),
                        atol=2e-3, rtol=2e-3)
    assert jnp.allclose(out3, _ref_f32(x2, w1b, b1b, w2b, b2b),
                        atol=5e-2, rtol=5e-2)

    print("KERNEL_OK")
</pallas_src>

<mosaic_0001>
module attributes {stable_mosaic.version = 11 : i64} {
  func.func @_encoder_kernel(%arg0: memref<8x32xf32, #tpu.memory_space<vmem>>, %arg1: memref<32x64xbf16, #tpu.memory_space<vmem>>, %arg2: memref<1x64xf32, #tpu.memory_space<vmem>>, %arg3: memref<64x16xbf16, #tpu.memory_space<vmem>>, %arg4: memref<1x16xf32, #tpu.memory_space<vmem>>, %arg5: memref<8x16xf32, #tpu.memory_space<vmem>>) attributes {dimension_semantics = [], scalar_prefetch = 0 : i64, scratch_operands = 0 : i64, tpu.core_type = #tpu.core_type<tc>} {
    %c0 = arith.constant 0 : index
    %c0_0 = arith.constant 0 : index
    %0 = vector.load %arg0[%c0, %c0_0] : memref<8x32xf32, #tpu.memory_space<vmem>>, vector<8x32xf32>
    %1 = arith.truncf %0 : vector<8x32xf32> to vector<8x32xbf16>
    %c0_1 = arith.constant 0 : index
    %c0_2 = arith.constant 0 : index
    %2 = vector.load %arg1[%c0_1, %c0_2] : memref<32x64xbf16, #tpu.memory_space<vmem>>, vector<32x64xbf16>
    %cst = arith.constant dense<0.000000e+00> : vector<8x64xf32>
    %3 = tpu.matmul %1, %2, %cst {dimension_numbers = #tpu.dot_dimension_numbers<[1], [0], [0], [1], [0, 0, 1, 1], [], []>} : vector<8x32xbf16>, vector<32x64xbf16>, vector<8x64xf32> -> vector<8x64xf32>
    %c0_3 = arith.constant 0 : index
    %c0_4 = arith.constant 0 : index
    %4 = vector.load %arg2[%c0_3, %c0_4] : memref<1x64xf32, #tpu.memory_space<vmem>>, vector<1x64xf32>
    %5 = vector.broadcast %4 : vector<1x64xf32> to vector<8x64xf32>
    %6 = arith.addf %3, %5 : vector<8x64xf32>
    %cst_5 = arith.constant 0.000000e+00 : f32
    %7 = vector.broadcast %cst_5 : f32 to vector<8x64xf32>
    %8 = arith.maximumf %6, %7 : vector<8x64xf32>
    %9 = arith.truncf %8 : vector<8x64xf32> to vector<8x64xbf16>
    %c0_6 = arith.constant 0 : index
    %c0_7 = arith.constant 0 : index
    %10 = vector.load %arg3[%c0_6, %c0_7] : memref<64x16xbf16, #tpu.memory_space<vmem>>, vector<64x16xbf16>
    %cst_8 = arith.constant dense<0.000000e+00> : vector<8x16xf32>
    %11 = tpu.matmul %9, %10, %cst_8 {dimension_numbers = #tpu.dot_dimension_numbers<[1], [0], [0], [1], [0, 0, 1, 1], [], []>} : vector<8x64xbf16>, vector<64x16xbf16>, vector<8x16xf32> -> vector<8x16xf32>
    %c0_9 = arith.constant 0 : index
    %c0_10 = arith.constant 0 : index
    %12 = vector.load %arg4[%c0_9, %c0_10] : memref<1x16xf32, #tpu.memory_space<vmem>>, vector<1x16xf32>
    %13 = vector.broadcast %12 : vector<1x16xf32> to vector<8x16xf32>
    %14 = arith.addf %11, %13 : vector<8x16xf32>
    %c0_11 = arith.constant 0 : index
    %c0_12 = arith.constant 0 : index
    %15 = vector.load %arg5[%c0_11, %c0_12] : memref<8x16xf32, #tpu.memory_space<vmem>>, vector<8x16xf32>
    tpu.vector_store %arg5[%c0_11, %c0_12], %14 {strides = array<i32>} : memref<8x16xf32, #tpu.memory_space<vmem>>, vector<8x16xf32>,
    return
  }
}

</mosaic_0001>

<llo_original>
// kernel: encoder_forward.1
$region0: #{encoder_forward.1}
  #allocation0 [shape = 'u32[]', space=smem, size = 0x4, offset = 0x4, fixed_abs, tag = 'smem constant byte address 0x4 - core index']
  #allocation1 [shape = 'u32[144,128]{1,0:T(1,128)}', space=vmem, size = 0x12000, scoped, tag = 'internal scratch']
  %s0 = inlined_call_operand.vmem [shape: f32[8,32], index: 0, kind: input, shape index: {}]
  %s1 = inlined_call_operand.vmem [shape: bf16[32,64], index: 1, kind: input, shape index: {}]
  %s2 = inlined_call_operand.vmem [shape: f32[1,64], index: 2, kind: input, shape index: {}]
  %s3 = inlined_call_operand.vmem [shape: bf16[64,16], index: 3, kind: input, shape index: {}]
  %s4 = inlined_call_operand.vmem [shape: f32[1,16], index: 4, kind: input, shape index: {}]
  %s5 = inlined_call_operand.hbm [shape: f32[8,16], index: 5, kind: output, shape index: {}]
  %s6 = sld [smem:[#allocation0]]
  $region30: #{encoder_forward.1} parent=0
    _
  %s8 = ssub.s32 1, %s6
  %s9 = scalar_select 0, %s8, %s6
  $region1: #{encoder_forward.1} parent=0
    #allocation2 [shape = 'u8[4096]{0}', space=vmem, size = 0x1000, scoped, tag = 'output window, operand 0, single buffered']
    #allocation3 [shape = 's32[1]{0}', space=sflag, size = 0x4, scoped, tag = 'scoped memory for encoder_forward.1']
    %10 = vsyncpa [#allocation3], 0
    // Predicated region
    $region2: #{encoder_forward.1} parent=1 // pred_check
      _
    $region3: #{encoder_forward.1} parent=1 // pred_check_branch
      %12 = sbr.rel (0) target = $region5
    $region4: #{encoder_forward.1} parent=1 // pred_region
      _
    $region5: #{encoder_forward.1} parent=1 // pred_fallthru
      _
    // Predicated region
    $region6: #{encoder_forward.1} parent=1 // pred_check
      _
    $region7: #{encoder_forward.1} parent=1 // pred_check_branch
      %14 = sbr.rel (0) target = $region9
    $region8: #{encoder_forward.1} parent=1 // pred_region
      _
    $region9: #{encoder_forward.1} parent=1 // pred_fallthru
      _
    // Predicated region
    $region10: #{encoder_forward.1} parent=1 // pred_check
      _
    $region11: #{encoder_forward.1} parent=1 // pred_check_branch
      %16 = sbr.rel (0) target = $region13
    $region12: #{encoder_forward.1} parent=1 // pred_region
      _
    $region13: #{encoder_forward.1} parent=1 // pred_fallthru
      _
    // Predicated region
    $region14: #{encoder_forward.1} parent=1 // pred_check
      _
    $region15: #{encoder_forward.1} parent=1 // pred_check_branch
      %18 = sbr.rel (0) target = $region17
    $region16: #{encoder_forward.1} parent=1 // pred_region
      _
    $region17: #{encoder_forward.1} parent=1 // pred_fallthru
      _
    // Predicated region
    $region18: #{encoder_forward.1} parent=1 // pred_check
      _
    $region19: #{encoder_forward.1} parent=1 // pred_check_branch
      %20 = sbr.rel (0) target = $region21
    $region20: #{encoder_forward.1} parent=1 // pred_region
      _
    $region21: #{encoder_forward.1} parent=1 // pred_fallthru
      _
    %v22 = vld [vmem:[%s0] sm:$0xff]
    %v23 = vpack.c.bf16 %v22, %v22
    %v24 = vld [vmem:[%s1] sm:$0xf]
    %v25 = vld [vmem:[%s1 + $0x4] sm:$0xf]
    %v26 = vld [vmem:[%s1 + $0x8] sm:$0xf]
    %v27 = vld [vmem:[%s1 + $0xc] sm:$0xf]
    %v28 = vld [vmem:[%s2] sm:$0x1]
    %v30 = vlaneseq
    %v31 = vshrl.u32 %v30, 7
    %v32 = vsub.s32 0, %v31
    %v33 = vrot.slane %v28, %v32
    %v39 = vunpack.c.l.b16 %v24
    %v40 = vunpack.c.l.b16 %v25
    %v41 = vunpack.c.l.b16 %v26
    %v42 = vunpack.c.l.b16 %v27
    %v43 = vpack.c.b16 %v40, %v39
    %v44 = vpack.c.b16 %v42, %v41
    %vm47 = vcmask 261120
    %v49 = vsel %vm47, %v23, 0
    %51 = vmatprep.subr.bf16.mxu0 0
    %52 = vmatpush1.bf16.msra.mxu0 %v43
    %53 = vmatprep.subr.bf16.mxu0 0
    %54 = vmatpush1.bf16.msra.mxu0 %v44
    %55 = vmatprep.subr.bf16.mxu0 0
    %56 = vmatpush1.bf16.msra.mxu0 0
    %57 = vmatprep.subr.bf16.mxu0 0
    %58 = vmatpush1.bf16.msra.mxu0 0
    %59 = vmatprep.subr.bf16.mxu0 0
    %60 = vmatpush1.bf16.msra.mxu0 0
    %61 = vmatprep.subr.bf16.mxu0 0
    %62 = vmatpush1.bf16.msra.mxu0 0
    %63 = vmatprep.subr.bf16.mxu0 0
    %64 = vmatpush1.bf16.msra.mxu0 0
    %65 = vmatprep.subr.bf16.mxu0 0
    %66 = vmatpush1.bf16.msra.mxu0 0
    %67 = vmatprep.subr.bf16.mxu0 0
    %68 = vmatpush1.bf16.msra.mxu0 0
    %69 = vmatprep.subr.bf16.mxu0 0
    %70 = vmatpush1.bf16.msra.mxu0 0
    %71 = vmatprep.subr.bf16.mxu0 0
    %72 = vmatpush1.bf16.msra.mxu0 0
    %73 = vmatprep.subr.bf16.mxu0 0
    %74 = vmatpush1.bf16.msra.mxu0 0
    %75 = vmatprep.subr.bf16.mxu0 0
    %76 = vmatpush1.bf16.msra.mxu0 0
    %77 = vmatprep.subr.bf16.mxu0 0
    %78 = vmatpush1.bf16.msra.mxu0 0
    %79 = vmatprep.subr.bf16.mxu0 0
    %80 = vmatpush1.bf16.msra.mxu0 0
    %81 = vmatprep.subr.bf16.mxu0 0
    %82 = vmatpush1.bf16.msra.mxu0 0
    %83 = vmatprep.mubr.bf16.mxu0 0
    %84 = vmatmul.mubr.bf16.gmra.mrb[0].mxu0 %v49
    %v85 = vpop.f32.mrb[0].mxu0
    %v86 = vadd.f32 %v33, %v85
    %v87 = vpop.f32.mrb[0].mxu0
    %v88 = vpop.f32.mrb[0].mxu0
    %v89 = vpop.f32.mrb[0].mxu0
    %90 = vdwg.mxu0
    %v91 = vmax.f32 %v86, 0.0
    %v92 = vpack.c.bf16 %v91, %v91
    %v93 = vld [vmem:[%s3] sm:$0xf]
    %v94 = vld [vmem:[%s3 + $0x4] sm:$0xf]
    %v95 = vld [vmem:[%s3 + $0x8] sm:$0xf]
    %v96 = vld [vmem:[%s3 + $0xc] sm:$0xf]
    %v97 = vld [vmem:[%s3 + $0x10] sm:$0xf]
    %v98 = vld [vmem:[%s3 + $0x14] sm:$0xf]
    %v99 = vld [vmem:[%s3 + $0x18] sm:$0xf]
    %v100 = vld [vmem:[%s3 + $0x1c] sm:$0xf]
    %v101 = vld [vmem:[%s4] sm:$0x1]
    %v103 = vlaneseq
    %v104 = vshrl.u32 %v103, 7
    %v105 = vsub.s32 0, %v104
    %v106 = vrot.slane %v101, %v105
    %v116 = vunpack.c.l.b16 %v93
    %v117 = vunpack.c.l.b16 %v94
    %v118 = vunpack.c.l.b16 %v95
    %v119 = vunpack.c.l.b16 %v96
    %v120 = vunpack.c.l.b16 %v97
    %v121 = vunpack.c.l.b16 %v98
    %v122 = vunpack.c.l.b16 %v99
    %v123 = vunpack.c.l.b16 %v100
    %v124 = vpack.c.b16 %v117, %v116
    %v125 = vpack.c.b16 %v119, %v118
    %v126 = vpack.c.b16 %v121, %v120
    %v127 = vpack.c.b16 %v123, %v122
    %vm132 = vcmask 523264
    %v134 = vsel %vm132, %v92, 0
    %136 = vmatprep.subr.bf16.mxu0 0
    %137 = vmatpush1.bf16.msra.mxu0 %v124
    %138 = vmatprep.subr.bf16.mxu0 0
    %139 = vmatpush1.bf16.msra.mxu0 %v125
    %140 = vmatprep.subr.bf16.mxu0 0
    %141 = vmatpush1.bf16.msra.mxu0 %v126
    %142 = vmatprep.subr.bf16.mxu0 0
    %143 = vmatpush1.bf16.msra.mxu0 %v127
    %144 = vmatprep.subr.bf16.mxu0 0
    %145 = vmatpush1.bf16.msra.mxu0 0
    %146 = vmatprep.subr.bf16.mxu0 0
    %147 = vmatpush1.bf16.msra.mxu0 0
    %148 = vmatprep.subr.bf16.mxu0 0
    %149 = vmatpush1.bf16.msra.mxu0 0
    %150 = vmatprep.subr.bf16.mxu0 0
    %151 = vmatpush1.bf16.msra.mxu0 0
    %152 = vmatprep.subr.bf16.mxu0 0
    %153 = vmatpush1.bf16.msra.mxu0 0
    %154 = vmatprep.subr.bf16.mxu0 0
    %155 = vmatpush1.bf16.msra.mxu0 0
    %156 = vmatprep.subr.bf16.mxu0 0
    %157 = vmatpush1.bf16.msra.mxu0 0
    %158 = vmatprep.subr.bf16.mxu0 0
    %159 = vmatpush1.bf16.msra.mxu0 0
    %160 = vmatprep.subr.bf16.mxu0 0
    %161 = vmatpush1.bf16.msra.mxu0 0
    %162 = vmatprep.subr.bf16.mxu0 0
    %163 = vmatpush1.bf16.msra.mxu0 0
    %164 = vmatprep.subr.bf16.mxu0 0
    %165 = vmatpush1.bf16.msra.mxu0 0
    %166 = vmatprep.subr.bf16.mxu0 0
    %167 = vmatpush1.bf16.msra.mxu0 0
    %168 = vmatprep.mubr.bf16.mxu0 0
    %169 = vmatmul.mubr.bf16.gmra.mrb[0].mxu0 %v134
    %v170 = vpop.f32.mrb[0].mxu0
    %v171 = vadd.f32 %v106, %v170
    %v172 = vpop.f32.mrb[0].mxu0
    %v173 = vpop.f32.mrb[0].mxu0
    %v174 = vpop.f32.mrb[0].mxu0
    %175 = vdwg.mxu0
    %vm176 = vcmask 130048
    %177 = vst.msk [vmem:[#allocation2] sm:$0xff] %vm176, %v171
    // Predicated region
    $region22: #{encoder_forward.1} parent=1 // pred_check
      _
    $region23: #{encoder_forward.1} parent=1 // pred_check_branch
      %179 = sbr.rel (0) target = $region25
    $region24: #{encoder_forward.1} parent=1 // pred_region
      %s181 = ssub.s32 128, 128
      %182 = vsyncadd [#allocation3], %s181
      %s184 = sshll.u32 [#allocation2], 4
      %s185 = int_to_ptr.vmem [resolvable:$true] %s184
      %187 = dma.vmem_to_hbm [thread:$0]  %s185, 128, %s5, [#allocation3]
    $region25: #{encoder_forward.1} parent=1 // pred_fallthru
      _
    // Predicated region
    $region26: #{encoder_forward.1} parent=1 // pred_check
      _
    $region27: #{encoder_forward.1} parent=1 // pred_check_branch
      %189 = sbr.rel (0) target = $region29
    $region28: #{encoder_forward.1} parent=1 // pred_region
      %190 = dma.done [#allocation3], 128
    $region29: #{encoder_forward.1} parent=1 // pred_fallthru
      _
    %191 = vsyncpa [#allocation3], 1

</llo_original>
